<compile_context>
chip_gen: v7x
topology: tpu7x:2x2x1
jax: 0.10.0
libtpu: 0.0.40
codegen_flags: <defaults>
</compile_context>

<pallas_src>
import functools

import jax
import jax.numpy as jnp
import numpy as np
from jax import lax
from jax.experimental import pallas as pl
from jax.experimental.pallas import tpu as pltpu


def _make_grid(resolution, extents):
    # Mirrors the PyTorch _make_grid (torch.meshgrid default = 'ij' indexing).
    x1, z1, x2, z2 = extents
    z1 = z1 + 2.0
    z2 = z2 + 2.0
    zs = z2 + z1 - jnp.arange(z1, z2, resolution, dtype=jnp.float32)
    xs = jnp.arange(x1, x2, resolution, dtype=jnp.float32)
    zz, xx = jnp.meshgrid(zs, xs, indexing="ij")
    return jnp.stack([xx, 1.7 * jnp.ones_like(xx), zz], axis=-1)  # (Z, X, 3)


def _resampler_kernel(grid_ref, calib_ref, feat_ref, out_ref, *, C, H, W):
    # grid_ref : (3, TQ)     f32 world coords rows [x, 1.7, z] for this q-tile (VMEM)
    # calib_ref: (B, 9)      f32 row-major 3x3 calibrations (SMEM, scalar reads)
    # feat_ref : (1, C*H, W) features of this batch element, W last (VMEM)
    # out_ref  : (1, C, TQ)
    b = pl.program_id(0)
    TQ = grid_ref.shape[1]

    gx = grid_ref[0:1, :]   # (1, TQ) f32
    gy = grid_ref[1:2, :]
    gz = grid_ref[2:3, :]

    def cal(i, j):          # scalar f32 read from SMEM
        return calib_ref[b, 3 * i + j]

    # cam = calib @ [x, y, z]^T  — coordinate math always in f32.
    cam_u = cal(0, 0) * gx + cal(0, 1) * gy + cal(0, 2) * gz
    cam_v = cal(1, 0) * gx + cal(1, 1) * gy + cal(1, 2) * gz
    cam_w = cal(2, 0) * gx + cal(2, 1) * gy + cal(2, 2) * gz

    # Clamp |cam_w| away from zero so points at/behind the camera can never
    # produce Inf/NaN weights (they land far outside the image and sample 0).
    w_mag = jnp.maximum(jnp.abs(cam_w), 1e-6)
    w_safe = jnp.where(cam_w < 0.0, -w_mag, w_mag)

    # One EUP reciprocal + Newton refinement (restores full f32 accuracy)
    # instead of two VPU divides.
    inv_w = pl.reciprocal(w_safe, approx=True)
    inv_w = inv_w * (2.0 - w_safe * inv_w)
    inv_w = inv_w * (2.0 - w_safe * inv_w)

    # normalize -> clamp(-1.1, 1.1) -> grid_sample de-normalize folded into a
    # single clamp in pixel space (align_corners=False => ix = u_pix - 0.5).
    ix = jnp.clip(cam_u * inv_w - 0.5, (-0.1 * W - 1.0) * 0.5, (2.1 * W - 1.0) * 0.5)
    iy = jnp.clip(cam_v * inv_w - 0.5, (-0.1 * H - 1.0) * 0.5, (2.1 * H - 1.0) * 0.5)

    x0f = jnp.floor(ix)
    y0f = jnp.floor(iy)
    wx1 = ix - x0f          # (1, TQ)
    wy1 = iy - y0f
    x0 = x0f.astype(jnp.int32)
    y0 = y0f.astype(jnp.int32)

    # Separable bilinear weights.  Out-of-range taps never match the iota, so
    # they contribute zero weight — exactly F.grid_sample padding_mode='zeros'.
    w_iota = lax.broadcasted_iota(jnp.int32, (W, TQ), 0)
    h_iota = lax.broadcasted_iota(jnp.int32, (H, TQ), 0)
    wx_m = (jnp.where(w_iota == x0, 1.0 - wx1, 0.0)
            + jnp.where(w_iota == x0 + 1, wx1, 0.0))            # (W, TQ)
    wy_m = (jnp.where(h_iota == y0, 1.0 - wy1, 0.0)
            + jnp.where(h_iota == y0 + 1, wy1, 0.0))            # (H, TQ)

    # Stage 1 (MXU): contract W; LHS rows = C*H keep the systolic array fed
    # even for small C.  Cast weights to the feature dtype (bf16 inputs double
    # MXU throughput); accumulate in f32.
    t = jnp.dot(feat_ref[0], wx_m.astype(feat_ref.dtype),
                preferred_element_type=jnp.float32)             # (C*H, TQ) f32

    # Stage 2 (VPU multiply + sublane reduce): contract H with the Wy factor.
    t = t.reshape(C, H, TQ) * wy_m[None, :, :]
    out_ref[0] = jnp.sum(t, axis=1).astype(out_ref.dtype)


class Resampler:
    """Pallas port of the PyTorch Resampler module (forward only)."""

    def __init__(self, resolution, extents):
        self.near = extents[1]
        self.far = extents[3]
        self.grid = _make_grid(resolution, extents)  # (Z, X, 3) float32

    def __call__(self, features, calib):
        B, C, H, W = features.shape
        Z, X, _ = self.grid.shape
        Q = Z * X

        # Coordinate / projection inputs stay in float32 regardless of the
        # feature dtype (bf16 coordinates would shift bilinear taps).
        grid_flat = self.grid.reshape(Q, 3).T.astype(jnp.float32)   # (3, Q)
        calib_flat = jnp.asarray(calib).reshape(-1, 9).astype(jnp.float32)  # (B, 9)
        feat_flat = features.reshape(B, C * H, W)                   # contract W on MXU

        # Tile the query axis: pad Q up to a lane-friendly multiple of 128 and
        # pick the largest tile in {512, 384, 256, 128} that divides it.
        q_pad = ((Q + 127) // 128) * 128
        tq = next(t for t in (512, 384, 256, 128) if q_pad % t == 0)
        n_q = q_pad // tq
        if q_pad != Q:
            grid_flat = jnp.pad(grid_flat, ((0, 0), (0, q_pad - Q)))

        kernel = functools.partial(_resampler_kernel, C=C, H=H, W=W)
        out = pl.pallas_call(
            kernel,
            out_shape=jax.ShapeDtypeStruct((B, C, q_pad), features.dtype),
            grid=(B, n_q),
            in_specs=[
                # World-coordinate tile for the current q block.
                pl.BlockSpec((3, tq), lambda b, q: (0, q)),
                # All calibrations in SMEM; read as scalars inside the kernel.
                pl.BlockSpec(memory_space=pltpu.MemorySpace.SMEM),
                # Features of batch b; block index is q-invariant so the tile
                # stays resident across the inner q loop (no redundant DMA).
                pl.BlockSpec((1, C * H, W), lambda b, q: (b, 0, 0)),
            ],
            out_specs=pl.BlockSpec((1, C, tq), lambda b, q: (b, 0, q)),
            compiler_params=pltpu.CompilerParams(
                dimension_semantics=("parallel", "parallel"),
                # Tiles are sized to fit comfortably within v7x's 64 MiB VMEM;
                # raise the scoped limit explicitly but leave headroom.
                vmem_limit_bytes=48 * 1024 * 1024,
            ),
        )(grid_flat, calib_flat, feat_flat)

        # TODO(synk): for production-sized feature maps, add a scalar-prefetch
        # pre-pass computing per-q-tile (y, x) bounding boxes so the feature
        # index_map only DMAs the projected footprint band instead of full HxW.
        return out[:, :, :Q].reshape(B, C, Z, X)


def _reference(features, calib, grid):
    """Pure-JAX reference mirroring the PyTorch forward (incl. grid_sample)."""
    B, C, H, W = features.shape
    cam = jnp.einsum("bij,zxj->bzxi", calib, grid)          # (B, Z, X, 3)
    u = cam[..., 0] / cam[..., 2]
    v = cam[..., 1] / cam[..., 2]
    u = jnp.clip(u / W * 2.0 - 1.0, -1.1, 1.1)
    v = jnp.clip(v / H * 2.0 - 1.0, -1.1, 1.1)
    ix = ((u + 1.0) * W - 1.0) / 2.0
    iy = ((v + 1.0) * H - 1.0) / 2.0
    x0 = jnp.floor(ix)
    y0 = jnp.floor(iy)
    wx1 = ix - x0
    wx0 = 1.0 - wx1
    wy1 = iy - y0
    wy0 = 1.0 - wy1
    x0i = x0.astype(jnp.int32)
    x1i = x0i + 1
    y0i = y0.astype(jnp.int32)
    y1i = y0i + 1

    def corner(yi, xi, wgt):
        valid = (yi >= 0) & (yi < H) & (xi >= 0) & (xi < W)
        yc = jnp.clip(yi, 0, H - 1)
        xc = jnp.clip(xi, 0, W - 1)
        vals = jax.vmap(lambda f, yy, xx: f[:, yy, xx])(features, yc, xc)
        return vals * (wgt * valid)[:, None, :, :]

    return (corner(y0i, x0i, wy0 * wx0) + corner(y0i, x1i, wy0 * wx1)
            + corner(y1i, x0i, wy1 * wx0) + corner(y1i, x1i, wy1 * wx1))


if __name__ == "__main__":
    key = jax.random.PRNGKey(0)
    kf, kc = jax.random.split(key)

    B, C, H, W = 2, 4, 16, 16
    resolution = 1.0
    extents = (0.0, 0.0, 8.0, 8.0)   # -> grid of (Z=8, X=8)

    features = jax.random.normal(kf, (B, C, H, W), dtype=jnp.float32)

    # Deterministic synthetic camera calibration (keeps depth cam_w > 0 and
    # most sample points inside the image).
    base = jnp.array([[4.0, 0.0, 4.0],
                      [0.0, 4.0, 6.0],
                      [0.0, 0.0, 1.0]], dtype=jnp.float32)
    perturb = 0.05 * jax.random.uniform(kc, (B, 3, 3), dtype=jnp.float32,
                                        minval=-1.0, maxval=1.0)
    calib = base[None] + perturb  # (B, 3, 3)

    resampler = Resampler(resolution, extents)
    out = jax.block_until_ready(resampler(features, calib))

    ref = _reference(features, calib, resampler.grid)
    assert out.shape == ref.shape == (B, C, 8, 8)
    np.testing.assert_allclose(np.asarray(out), np.asarray(ref),
                               atol=2e-4, rtol=2e-4)
    print("KERNEL_OK")
</pallas_src>

<mosaic_0001>
module attributes {stable_mosaic.version = 11 : i64} {
  func.func @_resampler_kernel(%arg0: i32, %arg1: i32, %arg2: memref<3x128xf32, #tpu.memory_space<vmem>>, %arg3: memref<2x9xf32, #tpu.memory_space<smem>>, %arg4: memref<1x64x16xf32, #tpu.memory_space<vmem>>, %arg5: memref<1x4x128xf32, #tpu.memory_space<vmem>>) attributes {dimension_semantics = [#tpu.dimension_semantics<parallel>, #tpu.dimension_semantics<parallel>], iteration_bounds = array<i64: 2, 1>, scalar_prefetch = 0 : i64, scratch_operands = 0 : i64, tpu.core_type = #tpu.core_type<tc>, window_params = [{transform_indices = @transform_0, window_bounds = array<i64: 3, 128>}, {transform_indices = @transform_1, window_bounds = array<i64: 2, 9>}, {transform_indices = @transform_2, window_bounds = array<i64: 1, 64, 16>}, {transform_indices = @transform_3, window_bounds = array<i64: 1, 4, 128>}]} {
    %c0 = arith.constant 0 : index
    %c0_0 = arith.constant 0 : index
    %0 = vector.load %arg2[%c0, %c0_0] : memref<3x128xf32, #tpu.memory_space<vmem>>, vector<1x128xf32>
    %c1 = arith.constant 1 : index
    %c0_1 = arith.constant 0 : index
    %1 = vector.load %arg2[%c1, %c0_1] : memref<3x128xf32, #tpu.memory_space<vmem>>, vector<1x128xf32>
    %c2 = arith.constant 2 : index
    %c0_2 = arith.constant 0 : index
    %2 = vector.load %arg2[%c2, %c0_2] : memref<3x128xf32, #tpu.memory_space<vmem>>, vector<1x128xf32>
    %3 = arith.index_cast %arg0 : i32 to index
    %c0_3 = arith.constant 0 : index
    %4 = memref.load %arg3[%3, %c0_3] : memref<2x9xf32, #tpu.memory_space<smem>>
    %5 = vector.broadcast %4 : f32 to vector<1x128xf32>
    %6 = arith.mulf %5, %0 : vector<1x128xf32>
    %7 = arith.index_cast %arg0 : i32 to index
    %c1_4 = arith.constant 1 : index
    %8 = memref.load %arg3[%7, %c1_4] : memref<2x9xf32, #tpu.memory_space<smem>>
    %9 = vector.broadcast %8 : f32 to vector<1x128xf32>
    %10 = arith.mulf %9, %1 : vector<1x128xf32>
    %11 = arith.addf %6, %10 : vector<1x128xf32>
    %12 = arith.index_cast %arg0 : i32 to index
    %c2_5 = arith.constant 2 : index
    %13 = memref.load %arg3[%12, %c2_5] : memref<2x9xf32, #tpu.memory_space<smem>>
    %14 = vector.broadcast %13 : f32 to vector<1x128xf32>
    %15 = arith.mulf %14, %2 : vector<1x128xf32>
    %16 = arith.addf %11, %15 : vector<1x128xf32>
    %17 = arith.index_cast %arg0 : i32 to index
    %c3 = arith.constant 3 : index
    %18 = memref.load %arg3[%17, %c3] : memref<2x9xf32, #tpu.memory_space<smem>>
    %19 = vector.broadcast %18 : f32 to vector<1x128xf32>
    %20 = arith.mulf %19, %0 : vector<1x128xf32>
    %21 = arith.index_cast %arg0 : i32 to index
    %c4 = arith.constant 4 : index
    %22 = memref.load %arg3[%21, %c4] : memref<2x9xf32, #tpu.memory_space<smem>>
    %23 = vector.broadcast %22 : f32 to vector<1x128xf32>
    %24 = arith.mulf %23, %1 : vector<1x128xf32>
    %25 = arith.addf %20, %24 : vector<1x128xf32>
    %26 = arith.index_cast %arg0 : i32 to index
    %c5 = arith.constant 5 : index
    %27 = memref.load %arg3[%26, %c5] : memref<2x9xf32, #tpu.memory_space<smem>>
    %28 = vector.broadcast %27 : f32 to vector<1x128xf32>
    %29 = arith.mulf %28, %2 : vector<1x128xf32>
    %30 = arith.addf %25, %29 : vector<1x128xf32>
    %31 = arith.index_cast %arg0 : i32 to index
    %c6 = arith.constant 6 : index
    %32 = memref.load %arg3[%31, %c6] : memref<2x9xf32, #tpu.memory_space<smem>>
    %33 = vector.broadcast %32 : f32 to vector<1x128xf32>
    %34 = arith.mulf %33, %0 : vector<1x128xf32>
    %35 = arith.index_cast %arg0 : i32 to index
    %c7 = arith.constant 7 : index
    %36 = memref.load %arg3[%35, %c7] : memref<2x9xf32, #tpu.memory_space<smem>>
    %37 = vector.broadcast %36 : f32 to vector<1x128xf32>
    %38 = arith.mulf %37, %1 : vector<1x128xf32>
    %39 = arith.addf %34, %38 : vector<1x128xf32>
    %40 = arith.index_cast %arg0 : i32 to index
    %c8 = arith.constant 8 : index
    %41 = memref.load %arg3[%40, %c8] : memref<2x9xf32, #tpu.memory_space<smem>>
    %42 = vector.broadcast %41 : f32 to vector<1x128xf32>
    %43 = arith.mulf %42, %2 : vector<1x128xf32>
    %44 = arith.addf %39, %43 : vector<1x128xf32>
    %45 = math.absf %44 : vector<1x128xf32>
    %cst = arith.constant 9.99999997E-7 : f32
    %46 = vector.broadcast %cst : f32 to vector<1x128xf32>
    %47 = arith.maximumf %45, %46 : vector<1x128xf32>
    %cst_6 = arith.constant 0.000000e+00 : f32
    %48 = vector.broadcast %cst_6 : f32 to vector<1x128xf32>
    %49 = arith.cmpf olt, %44, %48 : vector<1x128xf32>
    %cst_7 = arith.constant 0.000000e+00 : f32
    %50 = vector.broadcast %cst_7 : f32 to vector<1x128xf32>
    %51 = arith.subf %50, %47 : vector<1x128xf32>
    %52 = arith.select %49, %51, %47 : vector<1x128xi1>, vector<1x128xf32>
    %53 = tpu.reciprocal %52 {approx = true} : vector<1x128xf32> -> vector<1x128xf32>
    %54 = arith.mulf %52, %53 : vector<1x128xf32>
    %cst_8 = arith.constant 2.000000e+00 : f32
    %55 = vector.broadcast %cst_8 : f32 to vector<1x128xf32>
    %56 = arith.subf %55, %54 : vector<1x128xf32>
    %57 = arith.mulf %53, %56 : vector<1x128xf32>
    %58 = arith.mulf %52, %57 : vector<1x128xf32>
    %cst_9 = arith.constant 2.000000e+00 : f32
    %59 = vector.broadcast %cst_9 : f32 to vector<1x128xf32>
    %60 = arith.subf %59, %58 : vector<1x128xf32>
    %61 = arith.mulf %57, %60 : vector<1x128xf32>
    %62 = arith.mulf %16, %61 : vector<1x128xf32>
    %cst_10 = arith.constant 5.000000e-01 : f32
    %63 = vector.broadcast %cst_10 : f32 to vector<1x128xf32>
    %64 = arith.subf %62, %63 : vector<1x128xf32>
    %cst_11 = arith.constant -1.300000e+00 : f32
    %cst_12 = arith.constant 1.630000e+01 : f32
    %65 = vector.broadcast %cst_11 : f32 to vector<1x128xf32>
    %66 = arith.maximumf %65, %64 : vector<1x128xf32>
    %67 = vector.broadcast %cst_12 : f32 to vector<1x128xf32>
    %68 = arith.minimumf %67, %66 : vector<1x128xf32>
    %69 = arith.mulf %30, %61 : vector<1x128xf32>
    %cst_13 = arith.constant 5.000000e-01 : f32
    %70 = vector.broadcast %cst_13 : f32 to vector<1x128xf32>
    %71 = arith.subf %69, %70 : vector<1x128xf32>
    %cst_14 = arith.constant -1.300000e+00 : f32
    %cst_15 = arith.constant 1.630000e+01 : f32
    %72 = vector.broadcast %cst_14 : f32 to vector<1x128xf32>
    %73 = arith.maximumf %72, %71 : vector<1x128xf32>
    %74 = vector.broadcast %cst_15 : f32 to vector<1x128xf32>
    %75 = arith.minimumf %74, %73 : vector<1x128xf32>
    %76 = math.floor %68 : vector<1x128xf32>
    %77 = math.floor %75 : vector<1x128xf32>
    %78 = arith.subf %68, %76 : vector<1x128xf32>
    %79 = arith.subf %75, %77 : vector<1x128xf32>
    %80 = arith.fptosi %76 : vector<1x128xf32> to vector<1x128xi32>
    %81 = arith.fptosi %77 : vector<1x128xf32> to vector<1x128xi32>
    %82 = tpu.iota {dimensions = array<i32: 0>} : vector<16x128xi32>
    %83 = tpu.iota {dimensions = array<i32: 0>} : vector<16x128xi32>
    %84 = vector.broadcast %80 : vector<1x128xi32> to vector<16x128xi32>
    %85 = arith.cmpi eq, %82, %84 : vector<16x128xi32>
    %cst_16 = arith.constant 1.000000e+00 : f32
    %86 = vector.broadcast %cst_16 : f32 to vector<1x128xf32>
    %87 = arith.subf %86, %78 : vector<1x128xf32>
    %cst_17 = arith.constant 0.000000e+00 : f32
    %88 = vector.shape_cast %87 : vector<1x128xf32> to vector<1x128xf32>
    %89 = vector.broadcast %88 : vector<1x128xf32> to vector<16x128xf32>
    %90 = vector.broadcast %cst_17 : f32 to vector<16x128xf32>
    %91 = arith.select %85, %89, %90 : vector<16x128xi1>, vector<16x128xf32>
    %c1_i32 = arith.constant 1 : i32
    %92 = vector.broadcast %c1_i32 : i32 to vector<1x128xi32>
    %93 = arith.addi %80, %92 : vector<1x128xi32>
    %94 = vector.broadcast %93 : vector<1x128xi32> to vector<16x128xi32>
    %95 = arith.cmpi eq, %82, %94 : vector<16x128xi32>
    %cst_18 = arith.constant 0.000000e+00 : f32
    %96 = vector.shape_cast %78 : vector<1x128xf32> to vector<1x128xf32>
    %97 = vector.broadcast %96 : vector<1x128xf32> to vector<16x128xf32>
    %98 = vector.broadcast %cst_18 : f32 to vector<16x128xf32>
    %99 = arith.select %95, %97, %98 : vector<16x128xi1>, vector<16x128xf32>
    %100 = arith.addf %91, %99 : vector<16x128xf32>
    %101 = vector.broadcast %81 : vector<1x128xi32> to vector<16x128xi32>
    %102 = arith.cmpi eq, %83, %101 : vector<16x128xi32>
    %cst_19 = arith.constant 1.000000e+00 : f32
    %103 = vector.broadcast %cst_19 : f32 to vector<1x128xf32>
    %104 = arith.subf %103, %79 : vector<1x128xf32>
    %cst_20 = arith.constant 0.000000e+00 : f32
    %105 = vector.shape_cast %104 : vector<1x128xf32> to vector<1x128xf32>
    %106 = vector.broadcast %105 : vector<1x128xf32> to vector<16x128xf32>
    %107 = vector.broadcast %cst_20 : f32 to vector<16x128xf32>
    %108 = arith.select %102, %106, %107 : vector<16x128xi1>, vector<16x128xf32>
    %c1_i32_21 = arith.constant 1 : i32
    %109 = vector.broadcast %c1_i32_21 : i32 to vector<1x128xi32>
    %110 = arith.addi %81, %109 : vector<1x128xi32>
    %111 = vector.broadcast %110 : vector<1x128xi32> to vector<16x128xi32>
    %112 = arith.cmpi eq, %83, %111 : vector<16x128xi32>
    %cst_22 = arith.constant 0.000000e+00 : f32
    %113 = vector.shape_cast %79 : vector<1x128xf32> to vector<1x128xf32>
    %114 = vector.broadcast %113 : vector<1x128xf32> to vector<16x128xf32>
    %115 = vector.broadcast %cst_22 : f32 to vector<16x128xf32>
    %116 = arith.select %112, %114, %115 : vector<16x128xi1>, vector<16x128xf32>
    %117 = arith.addf %108, %116 : vector<16x128xf32>
    %c0_23 = arith.constant 0 : index
    %c0_24 = arith.constant 0 : index
    %c0_25 = arith.constant 0 : index
    %118 = vector.load %arg4[%c0_23, %c0_24, %c0_25] : memref<1x64x16xf32, #tpu.memory_space<vmem>>, vector<1x64x16xf32>
    %119 = vector.shape_cast %118 : vector<1x64x16xf32> to vector<64x16xf32>
    %cst_26 = arith.constant dense<0.000000e+00> : vector<64x128xf32>
    %120 = tpu.matmul %119, %100, %cst_26 {dimension_numbers = #tpu.dot_dimension_numbers<[1], [0], [0], [1], [0, 0, 1, 1], [], []>} : vector<64x16xf32>, vector<16x128xf32>, vector<64x128xf32> -> vector<64x128xf32>
    %121 = vector.shape_cast %120 : vector<64x128xf32> to vector<4x16x128xf32>
    %122 = vector.shape_cast %117 : vector<16x128xf32> to vector<1x16x128xf32>
    %123 = vector.broadcast %122 : vector<1x16x128xf32> to vector<4x16x128xf32>
    %124 = arith.mulf %121, %123 : vector<4x16x128xf32>
    %cst_27 = arith.constant dense<0.000000e+00> : vector<4x128xf32>
    %125 = vector.multi_reduction <add>, %124, %cst_27 [1] : vector<4x16x128xf32> to vector<4x128xf32>
    %c0_28 = arith.constant 0 : index
    %c0_29 = arith.constant 0 : index
    %c0_30 = arith.constant 0 : index
    %126 = vector.load %arg5[%c0_28, %c0_29, %c0_30] : memref<1x4x128xf32, #tpu.memory_space<vmem>>, vector<1x4x128xf32>
    %127 = vector.shape_cast %126 : vector<1x4x128xf32> to vector<4x128xf32>
    %128 = vector.shape_cast %125 : vector<4x128xf32> to vector<1x4x128xf32>
    tpu.vector_store %arg5[%c0_28, %c0_29, %c0_30], %128 {strides = array<i32>} : memref<1x4x128xf32, #tpu.memory_space<vmem>>, vector<1x4x128xf32>,
    return
  }
  func.func @transform_0(%arg0: i32, %arg1: i32) -> (i32, i32) {
    %c0_i32 = arith.constant 0 : i32
    %c0_i32_0 = arith.constant 0 : i32
    return %c0_i32, %arg1 : i32, i32
  }
  func.func @transform_1(%arg0: i32, %arg1: i32) -> (i32, i32) {
    %c0_i32 = arith.constant 0 : i32
    %c0_i32_0 = arith.constant 0 : i32
    %c0_i32_1 = arith.constant 0 : i32
    return %c0_i32, %c0_i32_0 : i32, i32
  }
  func.func @transform_2(%arg0: i32, %arg1: i32) -> (i32, i32, i32) {
    %c0_i32 = arith.constant 0 : i32
    %c0_i32_0 = arith.constant 0 : i32
    %c0_i32_1 = arith.constant 0 : i32
    return %arg0, %c0_i32, %c0_i32_0 : i32, i32, i32
  }
  func.func @transform_3(%arg0: i32, %arg1: i32) -> (i32, i32, i32) {
    %c0_i32 = arith.constant 0 : i32
    %c0_i32_0 = arith.constant 0 : i32
    return %arg0, %c0_i32, %arg1 : i32, i32, i32
  }
}

</mosaic_0001>

<llo_original>
// kernel: tpu_custom_call.1
$region0: #{tpu_custom_call.1}
  #allocation0 [shape = 'u32[]', space=smem, size = 0x4, offset = 0x4, fixed_abs, tag = 'smem constant byte address 0x4 - core index']
  #allocation1 [shape = 'u32[144,128]{1,0:T(1,128)}', space=vmem, size = 0x12000, scoped, tag = 'internal scratch']
  %s0 = inlined_call_operand.vmem [shape: f32[3,128], index: 0, kind: input, shape index: {}]
  %s1 = inlined_call_operand.vmem [shape: f32[2,9], index: 1, kind: input, shape index: {}]
  %s2 = inlined_call_operand.vmem [shape: f32[2,64,16], index: 2, kind: input, shape index: {}]
  %s3 = inlined_call_operand.hbm [shape: f32[2,4,128], index: 3, kind: output, shape index: {}]
  %s4 = sld [smem:[#allocation0]]
  $region49: #{tpu_custom_call.1} parent=0
    _
  %s6 = ssub.s32 1, %s4
  %s7 = scalar_select 0, %s6, %s4
  $region1: #{tpu_custom_call.1} parent=0
    #allocation2 [shape = 'u8[1024]{0}', space=smem, size = 0x400, scoped, tag = 'input window, operand 1, single buffered']
    #allocation3 [shape = 's32[2]{0}', space=sflag, size = 0x8, scoped, tag = 'scoped memory for tpu_custom_call.1']
    #allocation4 [shape = 's32[2]{0}', space=sflag, size = 0x8, scoped, tag = 'scoped memory for tpu_custom_call.1']
    #allocation5 [shape = 'u8[4096]{0}', space=vmem, size = 0x1000, scoped, tag = 'output window, operand 0']
    %8 = vsyncpa [#allocation4], 0
    %9 = vsyncpa [#allocation3], 0
    %s10 = scalar_lea.sflag [#allocation3], 1
    %11 = vsyncpa %s10, 0
    loop: start=0, step=1, limit=4
    $region2: #{tpu_custom_call.1} parent=1 // loop_pre_header
      _
    $region3: #{tpu_custom_call.1} parent=1 // loop_header
      %s13 = sphi 0, %s17
      %p14 = scmp.ge.s32.totalorder %s13, 4
      %s20 = sphi 0, %s32
      %s21 = sphi 0, %s28
      %s22 = sphi 0, %s20
      %s23 = sphi 0, %s21
      %s24 = sphi 0, %s22
      %s25 = sphi 0, %s23
      %s35 = sphi 0, %s37
      %s38 = sphi 0, %s35
      %s39 = sphi 0, %s38
      %s55 = sphi 0, %s39
      %s59 = sphi 0, %s59
      %s61 = sphi 0, %s59
      %s62 = sphi 0, %s61
      %s76 = sphi 0, %s62
      %s82 = sphi 0, %s84
      %s85 = sphi 0, %s82
      %s86 = sphi 0, %s85
      %s102 = sphi 0, %s86
      %s110 = sphi 0, %s112
      %s113 = sphi 0, %s110
      %s114 = sphi 0, %s113
      %s130 = sphi 0, %s114
    $region4: #{tpu_custom_call.1} parent=1 // loop_header_branch
      %16 = sbr.rel (%p14) target = $region8
    $region5: #{tpu_custom_call.1} parent=1 // loop_body
      %s18 = ssub.s32 %s13, 1
      %s19 = ssub.s32 %s13, 2
      %s26 = sadd.s32 1, %s21
      %p27 = scmp.ge.s32.totalorder %s26, 1
      %s28 = scalar_select %p27, 0, %s26
      %s29 = sadd.s32 1, %s20
      %s30 = scalar_select %p27, %s29, %s20
      %p31 = scmp.ge.s32.totalorder %s30, 2
      %s32 = scalar_select %p31, 0, %s30
      %s33 = ssub.s32 %s21, %s28
      %p34 = scmp.eq.s32.totalorder %s33, 0
      %s36 = sadd.s32 %s35, 1
      %s37 = scalar_select %p34, %s35, %s36
      %p40 = pneg %p34
      %p41 = scmp.eq.s32.totalorder %s13, 1
      %p42 = por %p40, %p41
      %p43 = scmp.ne.s32.totalorder %s35, %s38
      %p44 = scmp.eq.s32.totalorder %s13, 0
      %p45 = por %p43, %p44
      %p46 = scmp.ne.s32.totalorder %s35, %s38
      %p47 = scmp.eq.s32.totalorder %s18, 1
      %p48 = por %p46, %p47
      %p49 = scmp.ne.s32.totalorder %s38, %s39
      %p50 = scmp.eq.s32.totalorder %s18, 0
      %p51 = por %p49, %p50
      %p52 = scmp.ne.s32.totalorder %s38, %s39
      %p53 = scmp.eq.s32.totalorder %s19, 1
      %p54 = por %p52, %p53
      %p56 = scmp.ne.s32.totalorder %s39, %s55
      %p57 = scmp.eq.s32.totalorder %s19, 0
      %p58 = por %p56, %p57
      %s60 = sadd.s32 %s59, 1
      %p63 = scmp.eq.s32.totalorder %s13, 1
      %p64 = scmp.ne.s32.totalorder %s59, %s61
      %p65 = scmp.eq.s32.totalorder %s13, 0
      %p66 = por %p64, %p65
      %p67 = scmp.ne.s32.totalorder %s59, %s61
      %p68 = scmp.eq.s32.totalorder %s18, 1
      %p69 = por %p67, %p68
      %p70 = scmp.ne.s32.totalorder %s61, %s62
      %p71 = scmp.eq.s32.totalorder %s18, 0
      %p72 = por %p70, %p71
      %p73 = scmp.ne.s32.totalorder %s61, %s62
      %p74 = scmp.eq.s32.totalorder %s19, 1
      %p75 = por %p73, %p74
      %p77 = scmp.ne.s32.totalorder %s62, %s76
      %p78 = scmp.eq.s32.totalorder %s19, 0
      %p79 = por %p77, %p78
      %s80 = ssub.s32 %s20, %s32
      %p81 = scmp.eq.s32.totalorder %s80, 0
      %s83 = sadd.s32 %s82, 1
      %s84 = scalar_select %p81, %s82, %s83
      %p87 = pneg %p81
      %p88 = scmp.eq.s32.totalorder %s13, 1
      %p89 = por %p87, %p88
      %p90 = scmp.ne.s32.totalorder %s82, %s85
      %p91 = scmp.eq.s32.totalorder %s13, 0
      %p92 = por %p90, %p91
      %p93 = scmp.ne.s32.totalorder %s82, %s85
      %p94 = scmp.eq.s32.totalorder %s18, 1
      %p95 = por %p93, %p94
      %p96 = scmp.ne.s32.totalorder %s85, %s86
      %p97 = scmp.eq.s32.totalorder %s18, 0
      %p98 = por %p96, %p97
      %p99 = scmp.ne.s32.totalorder %s85, %s86
      %p100 = scmp.eq.s32.totalorder %s19, 1
      %p101 = por %p99, %p100
      %p103 = scmp.ne.s32.totalorder %s86, %s102
      %p104 = scmp.eq.s32.totalorder %s19, 0
      %p105 = por %p103, %p104
      %s106 = ssub.s32 %s20, %s32
      %s107 = ssub.s32 %s21, %s28
      %s108 = sor.u32 %s106, %s107
      %p109 = scmp.eq.s32.totalorder %s108, 0
      %s111 = sadd.s32 %s110, 1
      %s112 = scalar_select %p109, %s110, %s111
      %p115 = pneg %p109
      %p116 = scmp.eq.s32.totalorder %s13, 1
      %p117 = por %p115, %p116
      %p118 = scmp.ne.s32.totalorder %s110, %s113
      %p119 = scmp.eq.s32.totalorder %s13, 0
      %p120 = por %p118, %p119
      %p121 = scmp.ne.s32.totalorder %s110, %s113
      %p122 = scmp.eq.s32.totalorder %s18, 1
      %p123 = por %p121, %p122
      %p124 = scmp.ne.s32.totalorder %s113, %s114
      %p125 = scmp.eq.s32.totalorder %s18, 0
      %p126 = por %p124, %p125
      %p127 = scmp.ne.s32.totalorder %s113, %s114
      %p128 = scmp.eq.s32.totalorder %s19, 1
      %p129 = por %p127, %p128
      %p131 = scmp.ne.s32.totalorder %s114, %s130
      %p132 = scmp.eq.s32.totalorder %s19, 0
      %p133 = por %p131, %p132
      %p134 = scmp.le.s32.totalorder 1, %s13
      %p135 = scmp.lt.s32.totalorder %s13, 3
      %p136 = pnand %p134, %p135
      %p137 = pneg %p136
      // Predicated region
      $region9: #{tpu_custom_call.1} parent=5 // pred_check
        _
      $region10: #{tpu_custom_call.1} parent=5 // pred_check_branch
        %139 = sbr.rel (%p136) target = $region12
      $region11: #{tpu_custom_call.1} parent=5 // pred_region
        %s140 = ssub.s32 %s13, 1
        // Predicated region
        $region13: #{tpu_custom_call.1} parent=11 // pred_check
          %p141 = pneg %p51
        $region14: #{tpu_custom_call.1} parent=11 // pred_check_branch
          %143 = sbr.rel (%p141) target = $region16
        $region15: #{tpu_custom_call.1} parent=11 // pred_region
          %p144 = scmp.lt.s32.totalorder %s23, 0
          %s145 = scalar_select %p144, %s23, 0
          %s146 = smul.addr %s145, 4
          %s147 = scalar_lea.vmem %s0, %s146
        $region16: #{tpu_custom_call.1} parent=11 // pred_fallthru
          _
        // Predicated region
        $region17: #{tpu_custom_call.1} parent=11 // pred_check
          %p148 = pneg %p72
        $region18: #{tpu_custom_call.1} parent=11 // pred_check_branch
          %150 = sbr.rel (%p148) target = $region20
        $region19: #{tpu_custom_call.1} parent=11 // pred_region
          %s152 = ssub.s32 32, 32
          %153 = vsyncadd [#allocation4], %s152
          %s155 = sshll.u32 %s1, 4
          %s156 = int_to_ptr.vmem [resolvable:$true] %s155
          %158 = dma.vmem_to_smem %s156, 32, [#allocation2], [#allocation4]
        $region20: #{tpu_custom_call.1} parent=11 // pred_fallthru
          _
      $region12: #{tpu_custom_call.1} parent=5 // pred_fallthru
        _
      %p159 = scmp.lt.s32.totalorder %s13, 2
      // Predicated region
      $region21: #{tpu_custom_call.1} parent=5 // pred_check
        %p160 = pneg %p159
      $region22: #{tpu_custom_call.1} parent=5 // pred_check_branch
        %162 = sbr.rel (%p160) target = $region24
      $region23: #{tpu_custom_call.1} parent=5 // pred_region
        // Predicated region
        $region25: #{tpu_custom_call.1} parent=23 // pred_check
          %p163 = pneg %p92
        $region26: #{tpu_custom_call.1} parent=23 // pred_check_branch
          %165 = sbr.rel (%p163) target = $region28
        $region27: #{tpu_custom_call.1} parent=23 // pred_region
          %p166 = scmp.lt.s32.totalorder %s20, 1
          %s167 = scalar_select %p166, %s20, 1
          %s168 = smul.addr %s167, 8
          %s169 = smul.addr %s168, 8
          %s170 = scalar_lea.vmem %s2, %s169
        $region28: #{tpu_custom_call.1} parent=23 // pred_fallthru
          _
      $region24: #{tpu_custom_call.1} parent=5 // pred_fallthru
        _
      %p171 = scmp.le.s32.totalorder 1, %s13
      %p172 = scmp.lt.s32.totalorder %s13, 3
      %p173 = pnand %p171, %p172
      %p174 = pneg %p173
      // Predicated region
      $region29: #{tpu_custom_call.1} parent=5 // pred_check
        _
      $region30: #{tpu_custom_call.1} parent=5 // pred_check_branch
        %176 = sbr.rel (%p173) target = $region32
      $region31: #{tpu_custom_call.1} parent=5 // pred_region
        %s177 = ssub.s32 %s13, 1
        // Predicated region
        $region33: #{tpu_custom_call.1} parent=31 // pred_check
          %p178 = pneg %p72
        $region34: #{tpu_custom_call.1} parent=31 // pred_check_branch
          %180 = sbr.rel (%p178) target = $region36
        $region35: #{tpu_custom_call.1} parent=31 // pred_region
          %181 = dma.done [#allocation4], 32
        $region36: #{tpu_custom_call.1} parent=31 // pred_fallthru
          _
        %182 = sfence
        %p183 = scmp.lt.s32.totalorder %s23, 0
        %s184 = scalar_select %p183, %s23, 0
        %s185 = smul.addr %s184, 4
        %s186 = scalar_lea.vmem %s0, %s185
        %p187 = pneg %p51
        %p188 = pneg %p48
        %p189 = pneg %p72
        %p190 = pneg %p69
        %p191 = scmp.lt.s32.totalorder %s22, 1
        %s192 = scalar_select %p191, %s22, 1
        %s193 = smul.addr %s192, 8
        %s194 = smul.addr %s193, 8
        %s195 = scalar_lea.vmem %s2, %s194
        %p196 = pneg %p98
        %p197 = pneg %p95
        %p198 = pneg %p126
        %p199 = pneg %p123
        %s200 = sand.u32 %s113, 1
        %s201 = scalar_lea.sflag [#allocation3], %s200
        %s202 = sand.u32 %s113, 1
        %s203 = smul.addr %s202, 4
        %s204 = scalar_lea.vmem [#allocation5], %s203
        %p205 = scmp.lt.s32.totalorder %s23, 0
        %s206 = scalar_select %p205, %s23, 0
        %s207 = smul.addr %s206, 4
        %s208 = scalar_lea.vmem %s0, %s207
        %p209 = scmp.lt.s32.totalorder %s22, 1
        %s210 = scalar_select %p209, %s22, 1
        %s211 = smul.addr %s210, 8
        %s212 = smul.addr %s211, 8
        %s213 = scalar_lea.vmem %s2, %s212
        %v214 = vld [vmem:[%s208] sm:$0x1]
        %v215 = vld [vmem:[%s208 + $0x1] sm:$0x1]
        %v216 = vld [vmem:[%s208 + $0x2] sm:$0x1]
        %s217 = smul.u32 %s22, 128
        %s218 = sld [smem:[#allocation2 + %s217]]
        %v219 = vstv %s218
        %v220 = vmul.f32 %v219, %v214
        %s221 = sadd.s32 %s217, 1
        %s222 = sld [smem:[#allocation2 + %s221]]
        %v223 = vstv %s222
        %v224 = vmul.f32 %v223, %v215
        %v225 = vadd.f32 %v220, %v224
        %s226 = sadd.s32 %s217, 2
        %s227 = sld [smem:[#allocation2 + %s226]]
        %v228 = vstv %s227
        %v229 = vmul.f32 %v228, %v216
        %v230 = vadd.f32 %v225, %v229
        %s231 = sadd.s32 %s217, 3
        %s232 = sld [smem:[#allocation2 + %s231]]
        %v233 = vstv %s232
        %v234 = vmul.f32 %v233, %v214
        %s235 = sadd.s32 %s217, 4
        %s236 = sld [smem:[#allocation2 + %s235]]
        %v237 = vstv %s236
        %v238 = vmul.f32 %v237, %v215
        %v239 = vadd.f32 %v234, %v238
        %s240 = sadd.s32 %s217, 5
        %s241 = sld [smem:[#allocation2 + %s240]]
        %v242 = vstv %s241
        %v243 = vmul.f32 %v242, %v216
        %v244 = vadd.f32 %v239, %v243
        %s245 = sadd.s32 %s217, 6
        %s246 = sld [smem:[#allocation2 + %s245]]
        %v247 = vstv %s246
        %v248 = vmul.f32 %v247, %v214
        %s249 = sadd.s32 %s217, 7
        %s250 = sld [smem:[#allocation2 + %s249]]
        %v251 = vstv %s250
        %v252 = vmul.f32 %v251, %v215
        %v253 = vadd.f32 %v248, %v252
        %s254 = sadd.s32 %s217, 8
        %s255 = sld [smem:[#allocation2 + %s254]]
        %v256 = vstv %s255
        %v257 = vmul.f32 %v256, %v216
        %v258 = vadd.f32 %v253, %v257
        %v259 = vand.u32 2147483647, %v258
        %v260 = vmax.f32 %v259, 1e-06
        %vm261 = vcmp.lt.f32.partialorder %v258, 0.0
        %v262 = vsub.f32 0.0, %v260
        %v263 = vsel %vm261, %v262, %v260
        %v264 = vrcp.pop %v263
        %v265 = vmul.f32 %v263, %v264
        %v266 = vsub.f32 2.0, %v265
        %v267 = vmul.f32 %v264, %v266
        %v268 = vmul.f32 %v263, %v267
        %v269 = vsub.f32 2.0, %v268
        %v270 = vmul.f32 %v267, %v269
        %v271 = vmul.f32 %v230, %v270
        %v272 = vsub.f32 %v271, 0.5
        %v273 = vmax.f32 %v272, -1.3
        %v274 = vmin.f32 %v273, 16.3
        %v275 = vmul.f32 %v244, %v270
        %v276 = vsub.f32 %v275, 0.5
        %v277 = vmax.f32 %v276, -1.3
        %v278 = vmin.f32 %v277, 16.3
        %v279 = vfloor.f32 %v274
        %v280 = vfloor.f32 %v278
        %v281 = vsub.f32 %v274, %v279
        %v282 = vsub.f32 %v278, %v280
        %v283 = vcvt.f32.s32.to.zero.pseudo %v279
        %v284 = vcvt.f32.s32.to.zero.pseudo %v280
        %v285 = vlaneseq
        %v286 = vshrl.u32 %v285, 7
        %v287 = vadd.s32 %v286, 8
        %v288 = vlaneseq
        %v289 = vshrl.u32 %v288, 7
        %v290 = vsub.s32 0, %v289
        %v291 = vrot.slane %v283, %v290
        %vm292 = vcmp.eq.s32.totalorder %v286, %v291
        %vm293 = vcmp.eq.s32.totalorder %v287, %v291
        %v294 = vsub.f32 1.0, %v281
        %v295 = vlaneseq
        %v296 = vshrl.u32 %v295, 7
        %v297 = vsub.s32 0, %v296
        %v298 = vrot.slane %v294, %v297
        %v299 = vsel %vm292, %v298, 0.0
        %v300 = vsel %vm293, %v298, 0.0
        %v301 = vadd.s32 %v283, 1
        %v302 = vlaneseq
        %v303 = vshrl.u32 %v302, 7
        %v304 = vsub.s32 0, %v303
        %v305 = vrot.slane %v301, %v304
        %vm306 = vcmp.eq.s32.totalorder %v286, %v305
        %vm307 = vcmp.eq.s32.totalorder %v287, %v305
        %v308 = vlaneseq
        %v309 = vshrl.u32 %v308, 7
        %v310 = vsub.s32 0, %v309
        %v311 = vrot.slane %v281, %v310
        %v312 = vsel %vm306, %v311, 0.0
        %v313 = vsel %vm307, %v311, 0.0
        %v314 = vadd.f32 %v299, %v312
        %v315 = vadd.f32 %v300, %v313
        %v316 = vlaneseq
        %v317 = vshrl.u32 %v316, 7
        %v318 = vsub.s32 0, %v317
        %v319 = vrot.slane %v284, %v318
        %vm320 = vcmp.eq.s32.totalorder %v286, %v319
        %vm321 = vcmp.eq.s32.totalorder %v287, %v319
        %v322 = vsub.f32 1.0, %v282
        %v323 = vlaneseq
        %v324 = vshrl.u32 %v323, 7
        %v325 = vsub.s32 0, %v324
        %v326 = vrot.slane %v322, %v325
        %v327 = vsel %vm320, %v326, 0.0
        %v328 = vsel %vm321, %v326, 0.0
        %v329 = vadd.s32 %v284, 1
        %v330 = vlaneseq
        %v331 = vshrl.u32 %v330, 7
        %v332 = vsub.s32 0, %v331
        %v333 = vrot.slane %v329, %v332
        %vm334 = vcmp.eq.s32.totalorder %v286, %v333
        %vm335 = vcmp.eq.s32.totalorder %v287, %v333
        %v336 = vlaneseq
        %v337 = vshrl.u32 %v336, 7
        %v338 = vsub.s32 0, %v337
        %v339 = vrot.slane %v282, %v338
        %v340 = vsel %vm334, %v339, 0.0
        %v341 = vsel %vm335, %v339, 0.0
        %v342 = vadd.f32 %v327, %v340
        %v343 = vadd.f32 %v328, %v341
        %v344 = vld [vmem:[%s213] sm:$0xff]
        %v345 = vld [vmem:[%s213 + $0x8] sm:$0xff]
        %v346 = vld [vmem:[%s213 + $0x10] sm:$0xff]
        %v347 = vld [vmem:[%s213 + $0x18] sm:$0xff]
        %v348 = vld [vmem:[%s213 + $0x20] sm:$0xff]
        %v349 = vld [vmem:[%s213 + $0x28] sm:$0xff]
        %v350 = vld [vmem:[%s213 + $0x30] sm:$0xff]
        %v351 = vld [vmem:[%s213 + $0x38] sm:$0xff]
        %vm352 = vcmask 130048
        %v354 = vsel %vm352, %v344, 0
        %v357 = vsel %vm352, %v345, 0
        %v360 = vsel %vm352, %v346, 0
        %v363 = vsel %vm352, %v347, 0
        %v366 = vsel %vm352, %v348, 0
        %v369 = vsel %vm352, %v349, 0
        %v372 = vsel %vm352, %v350, 0
        %v375 = vsel %vm352, %v351, 0
        %377 = vmatprep.subr.mxu0 0.0
        %378 = vmatpush1.msra.mxu0 %v314
        %379 = vmatprep.subr.mxu0 0.0
        %380 = vmatpush1.msra.mxu0 %v315
        %381 = vmatprep.subr.mxu0 0.0
        %382 = vmatpush1.msra.mxu0 0.0
        %383 = vmatprep.subr.mxu0 0.0
        %384 = vmatpush1.msra.mxu0 0.0
        %385 = vmatprep.subr.mxu0 0.0
        %386 = vmatpush1.msra.mxu0 0.0
        %387 = vmatprep.subr.mxu0 0.0
        %388 = vmatpush1.msra.mxu0 0.0
        %389 = vmatprep.subr.mxu0 0.0
        %390 = vmatpush1.msra.mxu0 0.0
        %391 = vmatprep.subr.mxu0 0.0
        %392 = vmatpush1.msra.mxu0 0.0
        %393 = vmatprep.subr.mxu0 0.0
        %394 = vmatpush1.msra.mxu0 0.0
        %395 = vmatprep.subr.mxu0 0.0
        %396 = vmatpush1.msra.mxu0 0.0
        %397 = vmatprep.subr.mxu0 0.0
        %398 = vmatpush1.msra.mxu0 0.0
        %399 = vmatprep.subr.mxu0 0.0
        %400 = vmatpush1.msra.mxu0 0.0
        %401 = vmatprep.subr.mxu0 0.0
        %402 = vmatpush1.msra.mxu0 0.0
        %403 = vmatprep.subr.mxu0 0.0
        %404 = vmatpush1.msra.mxu0 0.0
        %405 = vmatprep.subr.mxu0 0.0
        %406 = vmatpush1.msra.mxu0 0.0
        %407 = vmatprep.subr.mxu0 0.0
        %408 = vmatpush1.msra.mxu0 0.0
        %409 = vmatprep.subr.mxu0 0.0
        %410 = vmatpush1.msra.mxu0 0.0
        %411 = vmatprep.subr.mxu0 0.0
        %412 = vmatpush1.msra.mxu0 0.0
        %413 = vmatprep.subr.mxu0 0.0
        %414 = vmatpush1.msra.mxu0 0.0
        %415 = vmatprep.subr.mxu0 0.0
        %416 = vmatpush1.msra.mxu0 0.0
        %417 = vmatprep.subr.mxu0 0.0
        %418 = vmatpush1.msra.mxu0 0.0
        %419 = vmatprep.subr.mxu0 0.0
        %420 = vmatpush1.msra.mxu0 0.0
        %421 = vmatprep.subr.mxu0 0.0
        %422 = vmatpush1.msra.mxu0 0.0
        %423 = vmatprep.subr.mxu0 0.0
        %424 = vmatpush1.msra.mxu0 0.0
        %425 = vmatprep.subr.mxu0 0.0
        %426 = vmatpush1.msra.mxu0 0.0
        %427 = vmatprep.subr.mxu0 0.0
        %428 = vmatpush1.msra.mxu0 0.0
        %429 = vmatprep.subr.mxu0 0.0
        %430 = vmatpush1.msra.mxu0 0.0
        %431 = vmatprep.subr.mxu0 0.0
        %432 = vmatpush1.msra.mxu0 0.0
        %433 = vmatprep.subr.mxu0 0.0
        %434 = vmatpush1.msra.mxu0 0.0
        %435 = vmatprep.subr.mxu0 0.0
        %436 = vmatpush1.msra.mxu0 0.0
        %437 = vmatprep.subr.mxu0 0.0
        %438 = vmatpush1.msra.mxu0 0.0
        %439 = vmatprep.subr.mxu0 0.0
        %440 = vmatpush1.msra.mxu0 0.0
        %441 = vmatprep.mubr.f32.mxu0 0.0
        %442 = vmatmul.mubr.f32.gmra.mrb[0].mxu0 %v354
        %v443 = vpop.f32.mrb[0].mxu0
        %v444 = vadd.f32 0.0, %v443
        %v445 = vpop.f32.mrb[0].mxu0
        %446 = vmatprep.mubr.f32.mxu0 0.0
        %447 = vmatmul.mubr.f32.gmra.mrb[0].mxu0 %v357
        %v448 = vpop.f32.mrb[0].mxu0
        %v449 = vadd.f32 0.0, %v448
        %v450 = vpop.f32.mrb[0].mxu0
        %451 = vmatprep.mubr.f32.mxu0 0.0
        %452 = vmatmul.mubr.f32.gmra.mrb[0].mxu0 %v360
        %v453 = vpop.f32.mrb[0].mxu0
        %v454 = vadd.f32 0.0, %v453
        %v455 = vpop.f32.mrb[0].mxu0
        %456 = vmatprep.mubr.f32.mxu0 0.0
        %457 = vmatmul.mubr.f32.gmra.mrb[0].mxu0 %v363
        %v458 = vpop.f32.mrb[0].mxu0
        %v459 = vadd.f32 0.0, %v458
        %v460 = vpop.f32.mrb[0].mxu0
        %461 = vmatprep.mubr.f32.mxu0 0.0
        %462 = vmatmul.mubr.f32.gmra.mrb[0].mxu0 %v366
        %v463 = vpop.f32.mrb[0].mxu0
        %v464 = vadd.f32 0.0, %v463
        %v465 = vpop.f32.mrb[0].mxu0
        %466 = vmatprep.mubr.f32.mxu0 0.0
        %467 = vmatmul.mubr.f32.gmra.mrb[0].mxu0 %v369
        %v468 = vpop.f32.mrb[0].mxu0
        %v469 = vadd.f32 0.0, %v468
        %v470 = vpop.f32.mrb[0].mxu0
        %471 = vmatprep.mubr.f32.mxu0 0.0
        %472 = vmatmul.mubr.f32.gmra.mrb[0].mxu0 %v372
        %v473 = vpop.f32.mrb[0].mxu0
        %v474 = vadd.f32 0.0, %v473
        %v475 = vpop.f32.mrb[0].mxu0
        %476 = vmatprep.mubr.f32.mxu0 0.0
        %477 = vmatmul.mubr.f32.gmra.mrb[0].mxu0 %v375
        %v478 = vpop.f32.mrb[0].mxu0
        %v479 = vadd.f32 0.0, %v478
        %v480 = vpop.f32.mrb[0].mxu0
        %481 = vdwg.mxu0
        %v482 = vmul.f32 %v444, %v342
        %v483 = vmul.f32 %v449, %v343
        %v484 = vmul.f32 %v454, %v342
        %v485 = vmul.f32 %v459, %v343
        %v486 = vmul.f32 %v464, %v342
        %v487 = vmul.f32 %v469, %v343
        %v488 = vmul.f32 %v474, %v342
        %v489 = vmul.f32 %v479, %v343
        %v490 = vadd.f32 %v482, %v483
        %v491 = vrot.slane %v490, 4
        %v492 = vadd.f32 %v490, %v491
        %v493 = vrot.slane %v492, 2
        %v494 = vadd.f32 %v492, %v493
        %v495 = vrot.slane %v494, 1
        %v496 = vadd.f32 %v494, %v495
        %v497 = vadd.f32 %v484, %v485
        %v498 = vrot.slane %v497, 4
        %v499 = vadd.f32 %v497, %v498
        %v500 = vrot.slane %v499, 2
        %v501 = vadd.f32 %v499, %v500
        %v502 = vrot.slane %v501, 1
        %v503 = vadd.f32 %v501, %v502
        %v504 = vadd.f32 %v486, %v487
        %v505 = vrot.slane %v504, 4
        %v506 = vadd.f32 %v504, %v505
        %v507 = vrot.slane %v506, 2
        %v508 = vadd.f32 %v506, %v507
        %v509 = vrot.slane %v508, 1
        %v510 = vadd.f32 %v508, %v509
        %v511 = vadd.f32 %v488, %v489
        %v512 = vrot.slane %v511, 4
        %v513 = vadd.f32 %v511, %v512
        %v514 = vrot.slane %v513, 2
        %v515 = vadd.f32 %v513, %v514
        %v516 = vrot.slane %v515, 1
        %v517 = vadd.f32 %v515, %v516
        %vm522 = vcmask 1041409
        %v523 = vsel %vm522, %v503, %v496
        %vm524 = vcmask 1042434
        %v525 = vsel %vm524, %v510, %v523
        %vm526 = vcmask 1043459
        %v527 = vsel %vm526, %v517, %v525
        %529 = vst [vmem:[%s204] sm:$0xf] %v527
        %s530 = sand.u32 %s113, 1
        %s531 = scalar_lea.sflag [#allocation3], %s530
        %s532 = sand.u32 %s113, 1
        %s533 = smul.addr %s532, 4
        %s534 = scalar_lea.vmem [#allocation5], %s533
        // Predicated region
        $region37: #{tpu_custom_call.1} parent=31 // pred_check
          %p535 = pneg %p123
        $region38: #{tpu_custom_call.1} parent=31 // pred_check_branch
          %537 = sbr.rel (%p535) target = $region40
        $region39: #{tpu_custom_call.1} parent=31 // pred_region
          %s539 = ssub.s32 64, 64
          %540 = vsyncadd %s531, %s539
          %s541 = sadd.s32 %s23, %s22
          %s542 = smul.addr %s541, 64
          %s543 = scalar_lea.hbm %s3, %s542
          %s545 = sshll.u32 %s534, 4
          %s546 = int_to_ptr.vmem [resolvable:$true] %s545
          %548 = dma.vmem_to_hbm [thread:$0]  %s546, 64, %s543, %s531
        $region40: #{tpu_custom_call.1} parent=31 // pred_fallthru
          _
      $region32: #{tpu_custom_call.1} parent=5 // pred_fallthru
        _
      %p549 = scmp.le.s32.totalorder 2, %s13
      // Predicated region
      $region41: #{tpu_custom_call.1} parent=5 // pred_check
        %p550 = pneg %p549
      $region42: #{tpu_custom_call.1} parent=5 // pred_check_branch
        %552 = sbr.rel (%p550) target = $region44
      $region43: #{tpu_custom_call.1} parent=5 // pred_region
        %s553 = ssub.s32 %s13, 2
        // Predicated region
        $region45: #{tpu_custom_call.1} parent=43 // pred_check
          %p554 = pneg %p129
        $region46: #{tpu_custom_call.1} parent=43 // pred_check_branch
          %556 = sbr.rel (%p554) target = $region48
        $region47: #{tpu_custom_call.1} parent=43 // pred_region
          %s557 = sand.u32 %s114, 1
          %s558 = scalar_lea.sflag [#allocation3], %s557
          %s559 = sand.u32 %s114, 1
          %s560 = smul.addr %s559, 4
          %s561 = scalar_lea.vmem [#allocation5], %s560
          %562 = dma.done %s558, 64
        $region48: #{tpu_custom_call.1} parent=43 // pred_fallthru
          _
      $region44: #{tpu_custom_call.1} parent=5 // pred_fallthru
        _
    $region6: #{tpu_custom_call.1} parent=1 // loop_footer
      %s17 = sadd.s32 1, %s13
    $region7: #{tpu_custom_call.1} parent=1 // loop_footer_branch
      %12 = sbr.rel target = $region3
    $region8: #{tpu_custom_call.1} parent=1 // loop_exit
      _
    %563 = vsyncpa [#allocation3], 1
    %s564 = scalar_lea.sflag [#allocation3], 1
    %565 = vsyncpa %s564, 1
    %566 = vsyncpa [#allocation4], 1
    %s567 = scalar_lea.sflag [#allocation4], 1
    %568 = vsyncpa %s567, 1

</llo_original>
